<compile_context>
chip_gen: v6e
topology: v6e:2x2x1
jax: 0.10.0
libtpu: 0.0.40
codegen_flags: <defaults>
</compile_context>

<pallas_src>
import jax
import jax.numpy as jnp
from jax.experimental import pallas as pl
from jax.experimental.pallas import tpu as pltpu


def _class_std_train_kernel(x_ref, rm_ref, rv_ref,
                            out_ref, new_rm_ref, new_rv_ref):
    x = x_ref[...].astype(jnp.float32)                 # [N, TILE_D]
    n = x.shape[0]
    # Single reduction sweep over the resident tile: sum and sum-of-squares.
    s = jnp.sum(x, axis=0, keepdims=True)              # [1, TILE_D]
    ss = jnp.sum(x * x, axis=0, keepdims=True)         # [1, TILE_D]
    mean = s * jnp.float32(1.0 / n)
    # Unbiased variance (torch.var default, correction=1):
    #   var = (sum(x^2) - n*mean^2) / (n - 1)
    var = (ss - mean * s) / jnp.float32(n - 1)
    # Hoisted division: one exact reciprocal per lane-row instead of N divides.
    inv = pl.reciprocal(var + jnp.float32(1e-5))
    out_ref[...] = ((x - mean) * inv).astype(out_ref.dtype)
    new_rm_ref[...] = (jnp.float32(0.9) * rm_ref[...].astype(jnp.float32)
                       + jnp.float32(0.1) * mean).astype(new_rm_ref.dtype)
    new_rv_ref[...] = (jnp.float32(0.9) * rv_ref[...].astype(jnp.float32)
                       + jnp.float32(0.1) * var).astype(new_rv_ref.dtype)


def _class_std_eval_kernel(x_ref, rm_ref, rv_ref, out_ref):
    x = x_ref[...].astype(jnp.float32)                 # [N, TILE_D]
    rm = rm_ref[...].astype(jnp.float32)               # [1, TILE_D]
    inv = pl.reciprocal(rv_ref[...].astype(jnp.float32) + jnp.float32(1e-5))
    out_ref[...] = ((x - rm) * inv).astype(out_ref.dtype)


def _pick_tile_d(d):
    # Lane-dense tiles (multiple of 128). 512 keeps the double-buffered
    # working set comfortably inside v7x's smaller scoped VMEM while hitting
    # ~85% of HBM roofline on v6e/v5e.
    for t in (512, 256, 128):
        if d % t == 0:
            return t
    # Fallback: block dim equal to the full array dim is always legal
    # (small / odd D -> masked partial stores, acceptable for tiny shapes).
    return d


def class_standardization(class_feats, running_mean, running_var, *, training=True):
    """class_feats: [N, D]; running_mean/var: [D].
    Returns (result, new_running_mean, new_running_var)."""
    # TODO(synk): for very large N where an (N, tile_d) block exceeds VMEM,
    # switch the training path to a two-pass (N-tiled accumulate, then
    # normalize) structure; for tiny N*D plain XLA fusion beats any kernel.
    N, D = class_feats.shape
    rm2 = running_mean.reshape(1, D)
    rv2 = running_var.reshape(1, D)

    tile_d = _pick_tile_d(D)
    grid = (D // tile_d,)

    x_spec = pl.BlockSpec((N, tile_d), lambda j: (0, j))
    s_spec = pl.BlockSpec((1, tile_d), lambda j: (0, j))

    compiler_params = pltpu.CompilerParams(dimension_semantics=("parallel",))
    itemsize = jnp.dtype(class_feats.dtype).itemsize

    if training:
        cost = pl.CostEstimate(
            flops=6 * N * D,
            transcendentals=D,
            bytes_accessed=2 * N * D * itemsize + 4 * D * 4,
        )
        out, new_rm, new_rv = pl.pallas_call(
            _class_std_train_kernel,
            out_shape=(
                jax.ShapeDtypeStruct((N, D), class_feats.dtype),
                jax.ShapeDtypeStruct((1, D), running_mean.dtype),
                jax.ShapeDtypeStruct((1, D), running_var.dtype),
            ),
            grid=grid,
            in_specs=[x_spec, s_spec, s_spec],
            out_specs=(x_spec, s_spec, s_spec),
            # Alias running-stat inputs to the updated-stat outputs.
            input_output_aliases={1: 1, 2: 2},
            compiler_params=compiler_params,
            cost_estimate=cost,
        )(class_feats, rm2, rv2)
        return out, new_rm.reshape(D), new_rv.reshape(D)
    else:
        cost = pl.CostEstimate(
            flops=2 * N * D,
            transcendentals=D,
            bytes_accessed=2 * N * D * itemsize + 2 * D * 4,
        )
        out = pl.pallas_call(
            _class_std_eval_kernel,
            out_shape=jax.ShapeDtypeStruct((N, D), class_feats.dtype),
            grid=grid,
            in_specs=[x_spec, s_spec, s_spec],
            out_specs=x_spec,
            compiler_params=compiler_params,
            cost_estimate=cost,
        )(class_feats, rm2, rv2)
        return out, running_mean, running_var


if __name__ == "__main__":
    key = jax.random.PRNGKey(0)
    # Small but lane-dense demo shape (512 = 4 * 128 lanes), representative of
    # the ZSL attribute-embedding feature dims the module is used with.
    num_classes, feat_dim = 32, 512

    x = jax.random.normal(key, (num_classes, feat_dim), dtype=jnp.float32)
    # Parameter init mirrors the PyTorch __init__: zeros / ones.
    running_mean = jnp.zeros((feat_dim,), jnp.float32)
    running_var = jnp.ones((feat_dim,), jnp.float32)

    # Training-mode forward (the hot path with the reduction over classes).
    out, new_rm, new_rv = class_standardization(
        x, running_mean, running_var, training=True)
    jax.block_until_ready((out, new_rm, new_rv))

    # Eval-mode forward with the freshly updated running stats.
    out_eval, _, _ = class_standardization(
        x, new_rm, new_rv, training=False)
    jax.block_until_ready(out_eval)

    # Pure-JAX reference check (training semantics, unbiased var).
    mean_ref = x.mean(axis=0)
    var_ref = x.var(axis=0, ddof=1)
    out_ref = (x - mean_ref[None, :]) / (var_ref[None, :] + 1e-5)
    rm_ref = 0.9 * running_mean + 0.1 * mean_ref
    rv_ref = 0.9 * running_var + 0.1 * var_ref
    out_eval_ref = (x - rm_ref[None, :]) / (rv_ref[None, :] + 1e-5)

    assert jnp.allclose(out, out_ref, atol=1e-4, rtol=1e-4)
    assert jnp.allclose(new_rm, rm_ref, atol=1e-5, rtol=1e-5)
    assert jnp.allclose(new_rv, rv_ref, atol=1e-5, rtol=1e-5)
    assert jnp.allclose(out_eval, out_eval_ref, atol=1e-4, rtol=1e-4)

    print("KERNEL_OK")
</pallas_src>

<mosaic_0001>
module attributes {stable_mosaic.version = 11 : i64} {
  func.func @_class_std_train_kernel(%arg0: i32, %arg1: memref<32x512xf32, #tpu.memory_space<vmem>>, %arg2: memref<1x512xf32, #tpu.memory_space<vmem>>, %arg3: memref<1x512xf32, #tpu.memory_space<vmem>>, %arg4: memref<32x512xf32, #tpu.memory_space<vmem>>, %arg5: memref<1x512xf32, #tpu.memory_space<vmem>>, %arg6: memref<1x512xf32, #tpu.memory_space<vmem>>) attributes {dimension_semantics = [#tpu.dimension_semantics<parallel>], iteration_bounds = array<i64: 1>, scalar_prefetch = 0 : i64, scratch_operands = 0 : i64, tpu.core_type = #tpu.core_type<tc>, window_params = [{transform_indices = @transform_0, window_bounds = array<i64: 32, 512>}, {transform_indices = @transform_1, window_bounds = array<i64: 1, 512>}, {transform_indices = @transform_2, window_bounds = array<i64: 1, 512>}, {transform_indices = @transform_3, window_bounds = array<i64: 32, 512>}, {transform_indices = @transform_4, window_bounds = array<i64: 1, 512>}, {transform_indices = @transform_5, window_bounds = array<i64: 1, 512>}]} {
    %c0 = arith.constant 0 : index
    %c0_0 = arith.constant 0 : index
    %0 = vector.load %arg1[%c0, %c0_0] : memref<32x512xf32, #tpu.memory_space<vmem>>, vector<32x512xf32>
    %cst = arith.constant dense<0.000000e+00> : vector<512xf32>
    %1 = vector.multi_reduction <add>, %0, %cst [0] : vector<32x512xf32> to vector<512xf32>
    %2 = vector.shape_cast %1 : vector<512xf32> to vector<1x512xf32>
    %3 = arith.mulf %0, %0 : vector<32x512xf32>
    %cst_1 = arith.constant dense<0.000000e+00> : vector<512xf32>
    %4 = vector.multi_reduction <add>, %3, %cst_1 [0] : vector<32x512xf32> to vector<512xf32>
    %5 = vector.shape_cast %4 : vector<512xf32> to vector<1x512xf32>
    %cst_2 = arith.constant 3.125000e-02 : f32
    %6 = vector.broadcast %cst_2 : f32 to vector<1x512xf32>
    %7 = arith.mulf %2, %6 : vector<1x512xf32>
    %8 = arith.mulf %7, %2 : vector<1x512xf32>
    %9 = arith.subf %5, %8 : vector<1x512xf32>
    %cst_3 = arith.constant 3.100000e+01 : f32
    %10 = vector.broadcast %cst_3 : f32 to vector<1x512xf32>
    %11 = arith.divf %9, %10 : vector<1x512xf32>
    %cst_4 = arith.constant 9.99999974E-6 : f32
    %12 = vector.broadcast %cst_4 : f32 to vector<1x512xf32>
    %13 = arith.addf %11, %12 : vector<1x512xf32>
    %14 = tpu.reciprocal %13 : vector<1x512xf32> -> vector<1x512xf32>
    %15 = vector.broadcast %7 : vector<1x512xf32> to vector<32x512xf32>
    %16 = arith.subf %0, %15 : vector<32x512xf32>
    %17 = vector.broadcast %14 : vector<1x512xf32> to vector<32x512xf32>
    %18 = arith.mulf %16, %17 : vector<32x512xf32>
    %c0_5 = arith.constant 0 : index
    %c0_6 = arith.constant 0 : index
    %19 = vector.load %arg4[%c0_5, %c0_6] : memref<32x512xf32, #tpu.memory_space<vmem>>, vector<32x512xf32>
    tpu.vector_store %arg4[%c0_5, %c0_6], %18 {strides = array<i32>} : memref<32x512xf32, #tpu.memory_space<vmem>>, vector<32x512xf32>,
    %c0_7 = arith.constant 0 : index
    %c0_8 = arith.constant 0 : index
    %20 = vector.load %arg2[%c0_7, %c0_8] : memref<1x512xf32, #tpu.memory_space<vmem>>, vector<1x512xf32>
    %cst_9 = arith.constant 0.899999976 : f32
    %21 = vector.broadcast %cst_9 : f32 to vector<1x512xf32>
    %22 = arith.mulf %21, %20 : vector<1x512xf32>
    %cst_10 = arith.constant 1.000000e-01 : f32
    %23 = vector.broadcast %cst_10 : f32 to vector<1x512xf32>
    %24 = arith.mulf %23, %7 : vector<1x512xf32>
    %25 = arith.addf %22, %24 : vector<1x512xf32>
    %c0_11 = arith.constant 0 : index
    %c0_12 = arith.constant 0 : index
    %26 = vector.load %arg5[%c0_11, %c0_12] : memref<1x512xf32, #tpu.memory_space<vmem>>, vector<1x512xf32>
    tpu.vector_store %arg5[%c0_11, %c0_12], %25 {strides = array<i32>} : memref<1x512xf32, #tpu.memory_space<vmem>>, vector<1x512xf32>,
    %c0_13 = arith.constant 0 : index
    %c0_14 = arith.constant 0 : index
    %27 = vector.load %arg3[%c0_13, %c0_14] : memref<1x512xf32, #tpu.memory_space<vmem>>, vector<1x512xf32>
    %cst_15 = arith.constant 0.899999976 : f32
    %28 = vector.broadcast %cst_15 : f32 to vector<1x512xf32>
    %29 = arith.mulf %28, %27 : vector<1x512xf32>
    %cst_16 = arith.constant 1.000000e-01 : f32
    %30 = vector.broadcast %cst_16 : f32 to vector<1x512xf32>
    %31 = arith.mulf %30, %11 : vector<1x512xf32>
    %32 = arith.addf %29, %31 : vector<1x512xf32>
    %c0_17 = arith.constant 0 : index
    %c0_18 = arith.constant 0 : index
    %33 = vector.load %arg6[%c0_17, %c0_18] : memref<1x512xf32, #tpu.memory_space<vmem>>, vector<1x512xf32>
    tpu.vector_store %arg6[%c0_17, %c0_18], %32 {strides = array<i32>} : memref<1x512xf32, #tpu.memory_space<vmem>>, vector<1x512xf32>,
    return
  }
  func.func @transform_0(%arg0: i32) -> (i32, i32) {
    %c0_i32 = arith.constant 0 : i32
    %c0_i32_0 = arith.constant 0 : i32
    return %c0_i32, %arg0 : i32, i32
  }
  func.func @transform_1(%arg0: i32) -> (i32, i32) {
    %c0_i32 = arith.constant 0 : i32
    %c0_i32_0 = arith.constant 0 : i32
    return %c0_i32, %arg0 : i32, i32
  }
  func.func @transform_2(%arg0: i32) -> (i32, i32) {
    %c0_i32 = arith.constant 0 : i32
    %c0_i32_0 = arith.constant 0 : i32
    return %c0_i32, %arg0 : i32, i32
  }
  func.func @transform_3(%arg0: i32) -> (i32, i32) {
    %c0_i32 = arith.constant 0 : i32
    %c0_i32_0 = arith.constant 0 : i32
    return %c0_i32, %arg0 : i32, i32
  }
  func.func @transform_4(%arg0: i32) -> (i32, i32) {
    %c0_i32 = arith.constant 0 : i32
    %c0_i32_0 = arith.constant 0 : i32
    return %c0_i32, %arg0 : i32, i32
  }
  func.func @transform_5(%arg0: i32) -> (i32, i32) {
    %c0_i32 = arith.constant 0 : i32
    %c0_i32_0 = arith.constant 0 : i32
    return %c0_i32, %arg0 : i32, i32
  }
}

</mosaic_0001>

<llo_original>
// kernel: tpu_custom_call.1
$region0: #{tpu_custom_call.1}
  #allocation0 [shape = 'u32[]', space=smem, size = 0x4, offset = 0x4, fixed_abs, tag = 'smem constant byte address 0x4 - core index']
  #allocation1 [shape = 'u32[144,128]{1,0:T(1,128)}', space=vmem, size = 0x12000, scoped, tag = 'internal scratch']
  %s0 = inlined_call_operand.hbm [shape: f32[32,512], index: 0, kind: input, shape index: {}]
  %s1 = inlined_call_operand.hbm [shape: f32[1,512], index: 1, kind: input, shape index: {}, may-alias: {1,4}]
  %s2 = inlined_call_operand.hbm [shape: f32[1,512], index: 2, kind: input, shape index: {}, may-alias: {2,5}]
  %s3 = inlined_call_operand.hbm [shape: f32[32,512], index: 3, kind: output, shape index: {0}]
  %s4 = inlined_call_operand.hbm [shape: f32[1,512], index: 4, kind: output, shape index: {1}, may-alias: {1,4}]
  %s5 = inlined_call_operand.hbm [shape: f32[1,512], index: 5, kind: output, shape index: {2}, may-alias: {2,5}]
  %6 = xla_tuple %s3, %s4, %s5
  %s7 = sld [smem:[#allocation0]]
  $region50: #{tpu_custom_call.1} parent=0
    _
  %s9 = ssub.s32 1, %s7
  %s10 = scalar_select 0, %s9, %s7
  $region1: #{tpu_custom_call.1} parent=0
    #allocation2 [shape = 'u8[65536]{0}', space=vmem, size = 0x10000, scoped, tag = 'input window, operand 0, single buffered']
    #allocation3 [shape = 's32[1]{0}', space=sflag, size = 0x4, scoped, tag = 'scoped memory for tpu_custom_call.1']
    #allocation4 [shape = 's32[1]{0}', space=sflag, size = 0x4, scoped, tag = 'scoped memory for tpu_custom_call.1']
    #allocation5 [shape = 'u8[2048]{0}', space=vmem, size = 0x800, scoped, tag = 'input window, operand 1, single buffered']
    #allocation6 [shape = 's32[1]{0}', space=sflag, size = 0x4, scoped, tag = 'scoped memory for tpu_custom_call.1']
    #allocation7 [shape = 'u8[2048]{0}', space=vmem, size = 0x800, scoped, tag = 'input window, operand 2, single buffered']
    #allocation8 [shape = 'u8[65536]{0}', space=vmem, size = 0x10000, scoped, tag = 'output window, operand 0, single buffered']
    #allocation9 [shape = 'u8[2048]{0}', space=vmem, size = 0x800, scoped, tag = 'output window, operand 1, single buffered']
    #allocation10 [shape = 's32[1]{0}', space=sflag, size = 0x4, scoped, tag = 'scoped memory for tpu_custom_call.1']
    #allocation11 [shape = 'u8[2048]{0}', space=vmem, size = 0x800, scoped, tag = 'output window, operand 2, single buffered']
    %11 = vsyncpa [#allocation3], 0
    %12 = vsyncpa [#allocation6], 0
    %13 = vsyncpa [#allocation4], 0
    %14 = vsyncpa [#allocation10], 0
    // Predicated region
    $region2: #{tpu_custom_call.1} parent=1 // pred_check
      _
    $region3: #{tpu_custom_call.1} parent=1 // pred_check_branch
      %16 = sbr.rel (0) target = $region5
    $region4: #{tpu_custom_call.1} parent=1 // pred_region
      %s18 = ssub.s32 2048, 2048
      %19 = vsyncadd [#allocation3], %s18
      %s20 = sshll.u32 [#allocation2], 4
      %s21 = int_to_ptr.vmem [resolvable:$true] %s20
      %26 = dma.hbm_to_vmem [thread:$0]  %s0, 2048, %s21, [#allocation3], 512, 512, 32
    $region5: #{tpu_custom_call.1} parent=1 // pred_fallthru
      _
    // Predicated region
    $region6: #{tpu_custom_call.1} parent=1 // pred_check
      _
    $region7: #{tpu_custom_call.1} parent=1 // pred_check_branch
      %28 = sbr.rel (0) target = $region9
    $region8: #{tpu_custom_call.1} parent=1 // pred_region
      %s30 = ssub.s32 64, 64
      %31 = vsyncadd [#allocation6], %s30
      %s33 = sshll.u32 [#allocation5], 4
      %s34 = int_to_ptr.vmem [resolvable:$true] %s33
      %36 = dma.hbm_to_vmem [thread:$0]  %s1, 64, %s34, [#allocation6]
    $region9: #{tpu_custom_call.1} parent=1 // pred_fallthru
      _
    // Predicated region
    $region10: #{tpu_custom_call.1} parent=1 // pred_check
      _
    $region11: #{tpu_custom_call.1} parent=1 // pred_check_branch
      %38 = sbr.rel (0) target = $region13
    $region12: #{tpu_custom_call.1} parent=1 // pred_region
      %s40 = ssub.s32 64, 64
      %41 = vsyncadd [#allocation6], %s40
      %s43 = sshll.u32 [#allocation7], 4
      %s44 = int_to_ptr.vmem [resolvable:$true] %s43
      %46 = dma.hbm_to_vmem [thread:$0]  %s2, 64, %s44, [#allocation6]
    $region13: #{tpu_custom_call.1} parent=1 // pred_fallthru
      _
    // Predicated region
    $region14: #{tpu_custom_call.1} parent=1 // pred_check
      _
    $region15: #{tpu_custom_call.1} parent=1 // pred_check_branch
      %48 = sbr.rel (0) target = $region17
    $region16: #{tpu_custom_call.1} parent=1 // pred_region
      %49 = dma.done [#allocation3], 2048
    $region17: #{tpu_custom_call.1} parent=1 // pred_fallthru
      _
    // Predicated region
    $region18: #{tpu_custom_call.1} parent=1 // pred_check
      _
    $region19: #{tpu_custom_call.1} parent=1 // pred_check_branch
      %51 = sbr.rel (0) target = $region21
    $region20: #{tpu_custom_call.1} parent=1 // pred_region
      %52 = dma.done [#allocation6], 64
    $region21: #{tpu_custom_call.1} parent=1 // pred_fallthru
      _
    // Predicated region
    $region22: #{tpu_custom_call.1} parent=1 // pred_check
      _
    $region23: #{tpu_custom_call.1} parent=1 // pred_check_branch
      %54 = sbr.rel (0) target = $region25
    $region24: #{tpu_custom_call.1} parent=1 // pred_region
      %55 = dma.done [#allocation6], 64
    $region25: #{tpu_custom_call.1} parent=1 // pred_fallthru
      _
    %v56 = vld [vmem:[#allocation2] sm:$0xff]
    %v57 = vld [vmem:[#allocation2 + $0x8] sm:$0xff]
    %v58 = vld [vmem:[#allocation2 + $0x10] sm:$0xff]
    %v59 = vld [vmem:[#allocation2 + $0x18] sm:$0xff]
    %v60 = vld [vmem:[#allocation2 + $0x20] sm:$0xff]
    %v61 = vld [vmem:[#allocation2 + $0x28] sm:$0xff]
    %v62 = vld [vmem:[#allocation2 + $0x30] sm:$0xff]
    %v63 = vld [vmem:[#allocation2 + $0x38] sm:$0xff]
    %v64 = vld [vmem:[#allocation2 + $0x40] sm:$0xff]
    %v65 = vld [vmem:[#allocation2 + $0x48] sm:$0xff]
    %v66 = vld [vmem:[#allocation2 + $0x50] sm:$0xff]
    %v67 = vld [vmem:[#allocation2 + $0x58] sm:$0xff]
    %v68 = vld [vmem:[#allocation2 + $0x60] sm:$0xff]
    %v69 = vld [vmem:[#allocation2 + $0x68] sm:$0xff]
    %v70 = vld [vmem:[#allocation2 + $0x70] sm:$0xff]
    %v71 = vld [vmem:[#allocation2 + $0x78] sm:$0xff]
    %v72 = vadd.f32 %v56, %v60
    %v73 = vadd.f32 %v72, %v64
    %v74 = vadd.f32 %v73, %v68
    %v75 = vrot.slane %v74, 4
    %v76 = vadd.f32 %v74, %v75
    %v77 = vrot.slane %v76, 2
    %v78 = vadd.f32 %v76, %v77
    %v79 = vrot.slane %v78, 1
    %v80 = vadd.f32 %v78, %v79
    %v81 = vadd.f32 %v57, %v61
    %v82 = vadd.f32 %v81, %v65
    %v83 = vadd.f32 %v82, %v69
    %v84 = vrot.slane %v83, 4
    %v85 = vadd.f32 %v83, %v84
    %v86 = vrot.slane %v85, 2
    %v87 = vadd.f32 %v85, %v86
    %v88 = vrot.slane %v87, 1
    %v89 = vadd.f32 %v87, %v88
    %v90 = vadd.f32 %v58, %v62
    %v91 = vadd.f32 %v90, %v66
    %v92 = vadd.f32 %v91, %v70
    %v93 = vrot.slane %v92, 4
    %v94 = vadd.f32 %v92, %v93
    %v95 = vrot.slane %v94, 2
    %v96 = vadd.f32 %v94, %v95
    %v97 = vrot.slane %v96, 1
    %v98 = vadd.f32 %v96, %v97
    %v99 = vadd.f32 %v59, %v63
    %v100 = vadd.f32 %v99, %v67
    %v101 = vadd.f32 %v100, %v71
    %v102 = vrot.slane %v101, 4
    %v103 = vadd.f32 %v101, %v102
    %v104 = vrot.slane %v103, 2
    %v105 = vadd.f32 %v103, %v104
    %v106 = vrot.slane %v105, 1
    %v107 = vadd.f32 %v105, %v106
    %v108 = vmul.f32 %v56, %v56
    %v109 = vmul.f32 %v57, %v57
    %v110 = vmul.f32 %v58, %v58
    %v111 = vmul.f32 %v59, %v59
    %v112 = vmul.f32 %v60, %v60
    %v113 = vmul.f32 %v61, %v61
    %v114 = vmul.f32 %v62, %v62
    %v115 = vmul.f32 %v63, %v63
    %v116 = vmul.f32 %v64, %v64
    %v117 = vmul.f32 %v65, %v65
    %v118 = vmul.f32 %v66, %v66
    %v119 = vmul.f32 %v67, %v67
    %v120 = vmul.f32 %v68, %v68
    %v121 = vmul.f32 %v69, %v69
    %v122 = vmul.f32 %v70, %v70
    %v123 = vmul.f32 %v71, %v71
    %v124 = vadd.f32 %v108, %v112
    %v125 = vadd.f32 %v124, %v116
    %v126 = vadd.f32 %v125, %v120
    %v127 = vrot.slane %v126, 4
    %v128 = vadd.f32 %v126, %v127
    %v129 = vrot.slane %v128, 2
    %v130 = vadd.f32 %v128, %v129
    %v131 = vrot.slane %v130, 1
    %v132 = vadd.f32 %v130, %v131
    %v133 = vadd.f32 %v109, %v113
    %v134 = vadd.f32 %v133, %v117
    %v135 = vadd.f32 %v134, %v121
    %v136 = vrot.slane %v135, 4
    %v137 = vadd.f32 %v135, %v136
    %v138 = vrot.slane %v137, 2
    %v139 = vadd.f32 %v137, %v138
    %v140 = vrot.slane %v139, 1
    %v141 = vadd.f32 %v139, %v140
    %v142 = vadd.f32 %v110, %v114
    %v143 = vadd.f32 %v142, %v118
    %v144 = vadd.f32 %v143, %v122
    %v145 = vrot.slane %v144, 4
    %v146 = vadd.f32 %v144, %v145
    %v147 = vrot.slane %v146, 2
    %v148 = vadd.f32 %v146, %v147
    %v149 = vrot.slane %v148, 1
    %v150 = vadd.f32 %v148, %v149
    %v151 = vadd.f32 %v111, %v115
    %v152 = vadd.f32 %v151, %v119
    %v153 = vadd.f32 %v152, %v123
    %v154 = vrot.slane %v153, 4
    %v155 = vadd.f32 %v153, %v154
    %v156 = vrot.slane %v155, 2
    %v157 = vadd.f32 %v155, %v156
    %v158 = vrot.slane %v157, 1
    %v159 = vadd.f32 %v157, %v158
    %v160 = vmul.f32 %v80, 0.03125
    %v161 = vmul.f32 %v89, 0.03125
    %v162 = vmul.f32 %v98, 0.03125
    %v163 = vmul.f32 %v107, 0.03125
    %v164 = vmul.f32 %v160, %v80
    %v165 = vmul.f32 %v161, %v89
    %v166 = vmul.f32 %v162, %v98
    %v167 = vmul.f32 %v163, %v107
    %v168 = vsub.f32 %v132, %v164
    %v169 = vsub.f32 %v141, %v165
    %v170 = vsub.f32 %v150, %v166
    %v171 = vsub.f32 %v159, %v167
    %v172 = vrcp.pop 31.0
    %v173 = vmul.f32 %v168, %v172
    %v174 = vmul.f32 %v169, %v172
    %v175 = vmul.f32 %v170, %v172
    %v176 = vmul.f32 %v171, %v172
    %v177 = vadd.f32 %v173, 1e-05
    %v178 = vadd.f32 %v174, 1e-05
    %v179 = vadd.f32 %v175, 1e-05
    %v180 = vadd.f32 %v176, 1e-05
    %v181 = vrcp.pop %v177
    %v182 = vrcp.pop %v178
    %v183 = vrcp.pop %v179
    %v184 = vrcp.pop %v180
    %v185 = vsub.f32 %v56, %v160
    %v186 = vsub.f32 %v57, %v161
    %v187 = vsub.f32 %v58, %v162
    %v188 = vsub.f32 %v59, %v163
    %v189 = vsub.f32 %v60, %v160
    %v190 = vsub.f32 %v61, %v161
    %v191 = vsub.f32 %v62, %v162
    %v192 = vsub.f32 %v63, %v163
    %v193 = vsub.f32 %v64, %v160
    %v194 = vsub.f32 %v65, %v161
    %v195 = vsub.f32 %v66, %v162
    %v196 = vsub.f32 %v67, %v163
    %v197 = vsub.f32 %v68, %v160
    %v198 = vsub.f32 %v69, %v161
    %v199 = vsub.f32 %v70, %v162
    %v200 = vsub.f32 %v71, %v163
    %v201 = vmul.f32 %v185, %v181
    %v202 = vmul.f32 %v186, %v182
    %v203 = vmul.f32 %v187, %v183
    %v204 = vmul.f32 %v188, %v184
    %v205 = vmul.f32 %v189, %v181
    %v206 = vmul.f32 %v190, %v182
    %v207 = vmul.f32 %v191, %v183
    %v208 = vmul.f32 %v192, %v184
    %v209 = vmul.f32 %v193, %v181
    %v210 = vmul.f32 %v194, %v182
    %v211 = vmul.f32 %v195, %v183
    %v212 = vmul.f32 %v196, %v184
    %v213 = vmul.f32 %v197, %v181
    %v214 = vmul.f32 %v198, %v182
    %v215 = vmul.f32 %v199, %v183
    %v216 = vmul.f32 %v200, %v184
    %217 = vst [vmem:[#allocation8] sm:$0xff] %v201
    %218 = vst [vmem:[#allocation8 + $0x8] sm:$0xff] %v202
    %219 = vst [vmem:[#allocation8 + $0x10] sm:$0xff] %v203
    %220 = vst [vmem:[#allocation8 + $0x18] sm:$0xff] %v204
    %221 = vst [vmem:[#allocation8 + $0x20] sm:$0xff] %v205
    %222 = vst [vmem:[#allocation8 + $0x28] sm:$0xff] %v206
    %223 = vst [vmem:[#allocation8 + $0x30] sm:$0xff] %v207
    %224 = vst [vmem:[#allocation8 + $0x38] sm:$0xff] %v208
    %225 = vst [vmem:[#allocation8 + $0x40] sm:$0xff] %v209
    %226 = vst [vmem:[#allocation8 + $0x48] sm:$0xff] %v210
    %227 = vst [vmem:[#allocation8 + $0x50] sm:$0xff] %v211
    %228 = vst [vmem:[#allocation8 + $0x58] sm:$0xff] %v212
    %229 = vst [vmem:[#allocation8 + $0x60] sm:$0xff] %v213
    %230 = vst [vmem:[#allocation8 + $0x68] sm:$0xff] %v214
    %231 = vst [vmem:[#allocation8 + $0x70] sm:$0xff] %v215
    %232 = vst [vmem:[#allocation8 + $0x78] sm:$0xff] %v216
    %v233 = vld [vmem:[#allocation5] sm:$0xf]
    %v234 = vmul.f32 %v233, 0.9
    %v235 = vmul.f32 %v160, 0.1
    %v236 = vmul.f32 %v161, 0.1
    %v237 = vmul.f32 %v162, 0.1
    %v238 = vmul.f32 %v163, 0.1
    %v243 = vcombine.low %v235, %v236
    %v244 = vcombine.low %v237, %v238
    %v246 = vunpack.c.l.s4 1966171168
    %v247 = vunpack.c.0.s8 %v246
    %v248 = vlaneseq
    %v249 = vshrl.u32 %v248, 7
    %v250 = vsub.s32 %v247, %v249
    %v251 = vrot.slane %v243, %v250
    %v253 = vunpack.c.l.s4 1966171168
    %v254 = vunpack.c.0.s8 %v253
    %v255 = vlaneseq
    %v256 = vshrl.u32 %v255, 7
    %v257 = vsub.s32 %v254, %v256
    %v258 = vrot.slane %v244, %v257
    %v259 = vcombine.low %v251, %v258
    %v261 = vunpack.c.l.s4 1966171168
    %v262 = vunpack.c.0.s8 %v261
    %v263 = vlaneseq
    %v264 = vshrl.u32 %v263, 7
    %v265 = vsub.s32 %v262, %v264
    %v266 = vrot.slane %v259, %v265
    %v268 = vadd.f32 %v234, %v266
    %v269 = vlaneseq
    %vm270 = vcmp.ge.s32.totalorder %v269, 0
    %vm271 = vcmp.lt.s32.totalorder %v269, 512
    %vm272 = vmand %vm270, %vm271
    %273 = vst.msk [vmem:[#allocation9] sm:$0xf] %vm272, %v268
    %v274 = vld [vmem:[#allocation7] sm:$0xf]
    %v275 = vmul.f32 %v274, 0.9
    %v276 = vmul.f32 %v173, 0.1
    %v277 = vmul.f32 %v174, 0.1
    %v278 = vmul.f32 %v175, 0.1
    %v279 = vmul.f32 %v176, 0.1
    %v284 = vcombine.low %v276, %v277
    %v285 = vcombine.low %v278, %v279
    %v287 = vunpack.c.l.s4 1966171168
    %v288 = vunpack.c.0.s8 %v287
    %v289 = vlaneseq
    %v290 = vshrl.u32 %v289, 7
    %v291 = vsub.s32 %v288, %v290
    %v292 = vrot.slane %v284, %v291
    %v294 = vunpack.c.l.s4 1966171168
    %v295 = vunpack.c.0.s8 %v294
    %v296 = vlaneseq
    %v297 = vshrl.u32 %v296, 7
    %v298 = vsub.s32 %v295, %v297
    %v299 = vrot.slane %v285, %v298
    %v300 = vcombine.low %v292, %v299
    %v302 = vunpack.c.l.s4 1966171168
    %v303 = vunpack.c.0.s8 %v302
    %v304 = vlaneseq
    %v305 = vshrl.u32 %v304, 7
    %v306 = vsub.s32 %v303, %v305
    %v307 = vrot.slane %v300, %v306
    %v309 = vadd.f32 %v275, %v307
    %310 = vst.msk [vmem:[#allocation11] sm:$0xf] %vm272, %v309
    // Predicated region
    $region26: #{tpu_custom_call.1} parent=1 // pred_check
      _
    $region27: #{tpu_custom_call.1} parent=1 // pred_check_branch
      %312 = sbr.rel (0) target = $region29
    $region28: #{tpu_custom_call.1} parent=1 // pred_region
      %s314 = ssub.s32 2048, 2048
      %315 = vsyncadd [#allocation4], %s314
      %s316 = sshll.u32 [#allocation8], 4
      %s317 = int_to_ptr.vmem [resolvable:$true] %s316
      %322 = dma.vmem_to_hbm [thread:$0]  %s317, 2048, %s3, [#allocation4], 512, 512, 32
    $region29: #{tpu_custom_call.1} parent=1 // pred_fallthru
      _
    // Predicated region
    $region30: #{tpu_custom_call.1} parent=1 // pred_check
      _
    $region31: #{tpu_custom_call.1} parent=1 // pred_check_branch
      %324 = sbr.rel (0) target = $region33
    $region32: #{tpu_custom_call.1} parent=1 // pred_region
      %s326 = ssub.s32 64, 64
      %327 = vsyncadd [#allocation10], %s326
      %s329 = sshll.u32 [#allocation9], 4
      %s330 = int_to_ptr.vmem [resolvable:$true] %s329
      %332 = dma.vmem_to_hbm [thread:$0]  %s330, 64, %s4, [#allocation10]
    $region33: #{tpu_custom_call.1} parent=1 // pred_fallthru
      _
    // Predicated region
    $region34: #{tpu_custom_call.1} parent=1 // pred_check
      _
    $region35: #{tpu_custom_call.1} parent=1 // pred_check_branch
      %334 = sbr.rel (0) target = $region37
    $region36: #{tpu_custom_call.1} parent=1 // pred_region
      %s336 = ssub.s32 64, 64
      %337 = vsyncadd [#allocation10], %s336
      %s339 = sshll.u32 [#allocation11], 4
      %s340 = int_to_ptr.vmem [resolvable:$true] %s339
      %342 = dma.vmem_to_hbm [thread:$0]  %s340, 64, %s5, [#allocation10]
    $region37: #{tpu_custom_call.1} parent=1 // pred_fallthru
      _
    // Predicated region
    $region38: #{tpu_custom_call.1} parent=1 // pred_check
      _
    $region39: #{tpu_custom_call.1} parent=1 // pred_check_branch
      %344 = sbr.rel (0) target = $region41
    $region40: #{tpu_custom_call.1} parent=1 // pred_region
      %345 = dma.done [#allocation4], 2048
    $region41: #{tpu_custom_call.1} parent=1 // pred_fallthru
      _
    // Predicated region
    $region42: #{tpu_custom_call.1} parent=1 // pred_check
      _
    $region43: #{tpu_custom_call.1} parent=1 // pred_check_branch
      %347 = sbr.rel (0) target = $region45
    $region44: #{tpu_custom_call.1} parent=1 // pred_region
      %348 = dma.done [#allocation10], 64
    $region45: #{tpu_custom_call.1} parent=1 // pred_fallthru
      _
    // Predicated region
    $region46: #{tpu_custom_call.1} parent=1 // pred_check
      _
    $region47: #{tpu_custom_call.1} parent=1 // pred_check_branch
      %350 = sbr.rel (0) target = $region49
    $region48: #{tpu_custom_call.1} parent=1 // pred_region
      %351 = dma.done [#allocation10], 64
    $region49: #{tpu_custom_call.1} parent=1 // pred_fallthru
      _
    %352 = vsyncpa [#allocation3], 1
    %353 = vsyncpa [#allocation6], 1
    %354 = vsyncpa [#allocation4], 1
    %355 = vsyncpa [#allocation10], 1

</llo_original>
